<compile_context>
chip_gen: v7x
topology: tpu7x:2x2x1
jax: 0.10.0
libtpu: 0.0.40
codegen_flags: <defaults>
</compile_context>

<pallas_src>
import math

import jax
import jax.numpy as jnp
import numpy as np
from jax.experimental import pallas as pl
from jax.experimental.pallas import tpu as pltpu

_LANE = 128
_SUBLANE = 8
_TARGET_BLOCK_BYTES = 8 * 1024 * 1024          # ~8 MiB payload per block
_VMEM_LIMIT_BYTES = 48 * 1024 * 1024           # 4 live 8 MiB buffers + headroom


def _drop_path_kernel(keep_ref, scale_ref, x_ref, o_ref):
    """out = x * scale[b] if keep[b] else 0; scale precomputed = keep/keep_prob."""
    b = pl.program_id(0)

    @pl.when(keep_ref[b] != 0)
    def _():
        # Multiply against the f32 per-sample scale, then cast once to the
        # activation dtype (avoids quantizing 1/keep_prob to bf16 pre-multiply).
        o_ref[...] = (x_ref[...] * scale_ref[b]).astype(o_ref.dtype)

    @pl.when(keep_ref[b] == 0)
    def _():
        # Dropped sample: never read x_ref (its block was remapped/deduped away).
        o_ref[...] = jnp.zeros_like(o_ref)


def drop_path(x, drop_prob, key, *, scale_by_keep=True, training=True):
    """Pallas implementation of DropPath.forward."""
    if drop_prob == 0.0 or not training:
        return x

    keep_prob = 1.0 - drop_prob
    B = x.shape[0]
    N = int(math.prod(x.shape[1:]))
    itemsize = jnp.dtype(x.dtype).itemsize

    # Per-sample Bernoulli draw + scale, computed once in plain JAX (SMEM prefetch).
    keep_bool = jax.random.bernoulli(key, p=keep_prob, shape=(B,))
    keep_i32 = keep_bool.astype(jnp.int32)
    inv_keep = 1.0 / keep_prob if (scale_by_keep and keep_prob > 0.0) else 1.0
    scale_f32 = keep_bool.astype(jnp.float32) * jnp.float32(inv_keep)

    # ---- Layout: (B, rows, cols) with layout-legal, pad-free blocks ----------
    pad_cols = 0
    if N % _LANE == 0:
        rows, cols = N // _LANE, _LANE                 # lane-dense, no padding
    elif N * itemsize <= _TARGET_BLOCK_BYTES:
        rows, cols = 1, N                              # full-extent last-two dims: always legal
    else:
        # Rare fallback: huge AND non-128-divisible feature count.
        # TODO(synk): split into a 128-divisible body + small tail to avoid the pad copy.
        pad_cols = (-N) % _LANE
        rows, cols = (N + pad_cols) // _LANE, _LANE

    x2 = x.reshape(B, N)
    if pad_cols:
        x2 = jnp.pad(x2, ((0, 0), (0, pad_cols)))
    x3 = x2.reshape(B, rows, cols)

    # rows-block: multiple of 8 sized to ~8 MiB payload, or the full rows extent.
    r_block = max(_SUBLANE, (_TARGET_BLOCK_BYTES // (cols * itemsize)) // _SUBLANE * _SUBLANE)
    if rows <= r_block:
        r_block = rows
        num_r = 1
    else:
        num_r = -(-rows // r_block)                    # ragged trailing block is fine

    out3 = pl.pallas_call(
        _drop_path_kernel,
        out_shape=jax.ShapeDtypeStruct((B, rows, cols), x.dtype),
        grid_spec=pltpu.PrefetchScalarGridSpec(
            num_scalar_prefetch=2,
            grid=(B, num_r),
            in_specs=[pl.BlockSpec(
                (1, r_block, cols),
                # Dropped samples: every block maps to (0, 0, 0); consecutive
                # identical block indices dedupe, skipping the input DMA.
                lambda b, r, keep, scale: (b * keep[b], r * keep[b], 0))],
            out_specs=pl.BlockSpec((1, r_block, cols),
                                   lambda b, r, keep, scale: (b, r, 0)),
        ),
        compiler_params=pltpu.CompilerParams(
            dimension_semantics=("parallel", "parallel"),
            vmem_limit_bytes=_VMEM_LIMIT_BYTES,
        ),
    )(keep_i32, scale_f32, x3)

    out2 = out3.reshape(B, rows * cols)
    if pad_cols:
        out2 = out2[:, :N]
    return out2.reshape(x.shape)


if __name__ == "__main__":
    key = jax.random.PRNGKey(0)
    kx, kmask = jax.random.split(key)

    # NCHW input, small SAM2-style shape. N = 4*16*16 = 1024 -> lane-dense path.
    x = jax.random.normal(kx, (2, 4, 16, 16), dtype=jnp.float32)
    drop_prob = 0.25
    keep_prob = 1.0 - drop_prob

    y = drop_path(x, drop_prob, kmask, scale_by_keep=True, training=True)
    y = jax.block_until_ready(y)
    assert y.shape == x.shape and y.dtype == x.dtype

    x_np = np.asarray(x)
    y_np = np.asarray(y)

    # Exact reference: same per-sample Bernoulli draw, scaled by 1/keep_prob.
    keep_np = np.asarray(
        jax.random.bernoulli(kmask, p=keep_prob, shape=(x.shape[0],))
    ).astype(np.float32)
    expected = x_np * (keep_np[:, None, None, None] / keep_prob)
    assert np.allclose(y_np, expected, rtol=1e-5, atol=1e-5)

    # Each sample must be either all-zero (dropped) or x / keep_prob (kept).
    for b in range(x_np.shape[0]):
        kept = np.allclose(y_np[b], x_np[b] / keep_prob, rtol=1e-5, atol=1e-5)
        dropped = np.allclose(y_np[b], 0.0)
        assert kept or dropped, f"sample {b} is neither kept nor dropped"

    # Non-128-divisible feature count (N = 105) + bf16 + scale_by_keep=False:
    # exercises the pad-free (B, 1, N) full-extent path.
    xb = jax.random.normal(kx, (2, 3, 7, 5), dtype=jnp.bfloat16)
    yb = jax.block_until_ready(
        drop_path(xb, drop_prob, kmask, scale_by_keep=False, training=True)
    )
    keep_b = np.asarray(
        jax.random.bernoulli(kmask, p=keep_prob, shape=(xb.shape[0],))
    ).astype(np.float32)
    expected_b = np.asarray(xb).astype(np.float32) * keep_b[:, None, None, None]
    assert yb.shape == xb.shape and yb.dtype == xb.dtype
    assert np.allclose(np.asarray(yb).astype(np.float32), expected_b, rtol=1e-2, atol=1e-2)

    # Eval / drop_prob==0 paths are the identity (no kernel launch).
    y_eval = drop_path(x, drop_prob, kmask, training=False)
    assert np.allclose(np.asarray(y_eval), x_np)
    y_zero = drop_path(x, 0.0, kmask, training=True)
    assert np.allclose(np.asarray(y_zero), x_np)

    print("KERNEL_OK")
</pallas_src>

<mosaic_0001>
module attributes {stable_mosaic.version = 11 : i64} {
  func.func @_drop_path_kernel(%arg0: i32, %arg1: i32, %arg2: memref<2xi32, #tpu.memory_space<smem>>, %arg3: memref<2xf32, #tpu.memory_space<smem>>, %arg4: memref<1x8x128xf32, #tpu.memory_space<vmem>>, %arg5: memref<1x8x128xf32, #tpu.memory_space<vmem>>) attributes {dimension_semantics = [#tpu.dimension_semantics<parallel>, #tpu.dimension_semantics<parallel>], iteration_bounds = array<i64: 2, 1>, scalar_prefetch = 2 : i64, scratch_operands = 0 : i64, tpu.core_type = #tpu.core_type<tc>, window_params = [{transform_indices = @transform_0, window_bounds = array<i64: 1, 8, 128>}, {transform_indices = @transform_1, window_bounds = array<i64: 1, 8, 128>}]} {
    %0 = arith.index_cast %arg0 : i32 to index
    %1 = memref.load %arg2[%0] : memref<2xi32, #tpu.memory_space<smem>>
    %c0_i32 = arith.constant 0 : i32
    %2 = arith.cmpi ne, %1, %c0_i32 : i32
    %3 = arith.extui %2 : i1 to i32
    %c0_i32_0 = arith.constant 0 : i32
    %4 = arith.cmpi ne, %3, %c0_i32_0 : i32
    scf.if %4 {
      %c0 = arith.constant 0 : index
      %c0_3 = arith.constant 0 : index
      %c0_4 = arith.constant 0 : index
      %10 = vector.load %arg4[%c0, %c0_3, %c0_4] : memref<1x8x128xf32, #tpu.memory_space<vmem>>, vector<1x8x128xf32>
      %11 = arith.index_cast %arg0 : i32 to index
      %12 = memref.load %arg3[%11] : memref<2xf32, #tpu.memory_space<smem>>
      %13 = vector.broadcast %12 : f32 to vector<1x8x128xf32>
      %14 = arith.mulf %10, %13 : vector<1x8x128xf32>
      %c0_5 = arith.constant 0 : index
      %c0_6 = arith.constant 0 : index
      %c0_7 = arith.constant 0 : index
      %15 = vector.load %arg5[%c0_5, %c0_6, %c0_7] : memref<1x8x128xf32, #tpu.memory_space<vmem>>, vector<1x8x128xf32>
      tpu.vector_store %arg5[%c0_5, %c0_6, %c0_7], %14 {strides = array<i32>} : memref<1x8x128xf32, #tpu.memory_space<vmem>>, vector<1x8x128xf32>,
    } else {
    }
    %5 = arith.index_cast %arg0 : i32 to index
    %6 = memref.load %arg2[%5] : memref<2xi32, #tpu.memory_space<smem>>
    %c0_i32_1 = arith.constant 0 : i32
    %7 = arith.cmpi eq, %6, %c0_i32_1 : i32
    %8 = arith.extui %7 : i1 to i32
    %c0_i32_2 = arith.constant 0 : i32
    %9 = arith.cmpi ne, %8, %c0_i32_2 : i32
    scf.if %9 {
      %cst = arith.constant 0.000000e+00 : f32
      %10 = vector.broadcast %cst : f32 to vector<1x8x128xf32>
      %c0 = arith.constant 0 : index
      %c0_3 = arith.constant 0 : index
      %c0_4 = arith.constant 0 : index
      %11 = vector.load %arg5[%c0, %c0_3, %c0_4] : memref<1x8x128xf32, #tpu.memory_space<vmem>>, vector<1x8x128xf32>
      tpu.vector_store %arg5[%c0, %c0_3, %c0_4], %10 {strides = array<i32>} : memref<1x8x128xf32, #tpu.memory_space<vmem>>, vector<1x8x128xf32>,
    } else {
    }
    return
  }
  func.func @transform_0(%arg0: i32, %arg1: i32, %arg2: memref<2xi32, #tpu.memory_space<smem>>, %arg3: memref<2xf32, #tpu.memory_space<smem>>) -> (i32, i32, i32) {
    %0 = arith.index_cast %arg0 : i32 to index
    %1 = memref.load %arg2[%0] : memref<2xi32, #tpu.memory_space<smem>>
    %2 = arith.muli %arg0, %1 : i32
    %3 = arith.index_cast %arg0 : i32 to index
    %4 = memref.load %arg2[%3] : memref<2xi32, #tpu.memory_space<smem>>
    %5 = arith.muli %arg1, %4 : i32
    %c0_i32 = arith.constant 0 : i32
    %c0_i32_0 = arith.constant 0 : i32
    return %2, %5, %c0_i32 : i32, i32, i32
  }
  func.func @transform_1(%arg0: i32, %arg1: i32, %arg2: memref<2xi32, #tpu.memory_space<smem>>, %arg3: memref<2xf32, #tpu.memory_space<smem>>) -> (i32, i32, i32) {
    %c0_i32 = arith.constant 0 : i32
    %c0_i32_0 = arith.constant 0 : i32
    return %arg0, %arg1, %c0_i32 : i32, i32, i32
  }
}

</mosaic_0001>

<llo_original>
// kernel: tpu_custom_call.1
$region0: #{tpu_custom_call.1}
  #allocation0 [shape = 'u32[]', space=smem, size = 0x4, offset = 0x4, fixed_abs, tag = 'smem constant byte address 0x4 - core index']
  #allocation1 [shape = 'u32[144,128]{1,0:T(1,128)}', space=vmem, size = 0x12000, scoped, tag = 'internal scratch']
  #allocation2 [shape = 's32[1]{0}', space=sflag, size = 0x4, scoped, tag = 'scoped memory for tpu_custom_call.1']
  #allocation3 [shape = 'u8[512]{0}', space=smem, size = 0x200, scoped, tag = 'prefetched SMEM operand 0']
  #allocation4 [shape = 'u8[512]{0}', space=smem, size = 0x200, scoped, tag = 'prefetched SMEM operand 1']
  %s0 = inlined_call_operand.hbm [shape: s32[2], index: 0, kind: input, shape index: {}]
  %s1 = inlined_call_operand.vmem [shape: f32[2], index: 1, kind: input, shape index: {}]
  %s2 = inlined_call_operand.hbm [shape: f32[2,8,128], index: 2, kind: input, shape index: {}]
  %s3 = inlined_call_operand.hbm [shape: f32[2,8,128], index: 3, kind: output, shape index: {}]
  %s4 = sld [smem:[#allocation0]]
  $region49: #{tpu_custom_call.1} parent=0
    _
  %s6 = ssub.s32 1, %s4
  %s7 = scalar_select 0, %s6, %s4
  %9 = dma.hbm_to_smem %s0, 16, [#allocation3], [#allocation2]
  %s10 = sshll.u32 %s1, 4
  %s11 = int_to_ptr.vmem [resolvable:$true] %s10
  %13 = dma.vmem_to_smem %s11, 16, [#allocation4], [#allocation2]
  %14 = dma.done [#allocation2], 32
  %15 = sfence
  $region1: #{tpu_custom_call.1} parent=0
    #allocation5 [shape = 'u8[8192]{0}', space=vmem, size = 0x2000, scoped, tag = 'input window, operand 2']
    #allocation6 [shape = 's32[2]{0}', space=sflag, size = 0x8, scoped, tag = 'scoped memory for tpu_custom_call.1']
    #allocation7 [shape = 's32[2]{0}', space=sflag, size = 0x8, scoped, tag = 'scoped memory for tpu_custom_call.1']
    #allocation8 [shape = 'u8[8192]{0}', space=vmem, size = 0x2000, scoped, tag = 'output window, operand 0']
    %16 = vsyncpa [#allocation6], 0
    %s17 = scalar_lea.sflag [#allocation6], 1
    %18 = vsyncpa %s17, 0
    %19 = vsyncpa [#allocation7], 0
    %s20 = scalar_lea.sflag [#allocation7], 1
    %21 = vsyncpa %s20, 0
    loop: start=0, step=1, limit=4
    $region2: #{tpu_custom_call.1} parent=1 // loop_pre_header
      _
    $region3: #{tpu_custom_call.1} parent=1 // loop_header
      %s23 = sphi 0, %s27
      %p24 = scmp.ge.s32.totalorder %s23, 4
      %s30 = sphi 0, %s42
      %s31 = sphi 0, %s38
      %s32 = sphi 0, %s30
      %s33 = sphi 0, %s31
      %s34 = sphi 0, %s32
      %s35 = sphi 0, %s33
      %s53 = sphi 0, %s55
      %s56 = sphi 0, %s53
      %s57 = sphi 0, %s56
      %s73 = sphi 0, %s57
      %s81 = sphi 0, %s83
      %s84 = sphi 0, %s81
      %s85 = sphi 0, %s84
      %s101 = sphi 0, %s85
    $region4: #{tpu_custom_call.1} parent=1 // loop_header_branch
      %26 = sbr.rel (%p24) target = $region8
    $region5: #{tpu_custom_call.1} parent=1 // loop_body
      %s28 = ssub.s32 %s23, 1
      %s29 = ssub.s32 %s23, 2
      %s36 = sadd.s32 1, %s31
      %p37 = scmp.ge.s32.totalorder %s36, 1
      %s38 = scalar_select %p37, 0, %s36
      %s39 = sadd.s32 1, %s30
      %s40 = scalar_select %p37, %s39, %s30
      %p41 = scmp.ge.s32.totalorder %s40, 2
      %s42 = scalar_select %p41, 0, %s40
      %s43 = sld [smem:[#allocation3 + %s30]]
      %s44 = smul.u32 %s30, %s43
      %s45 = smul.u32 %s31, %s43
      %s46 = sld [smem:[#allocation3 + %s42]]
      %s47 = smul.u32 %s42, %s46
      %s48 = smul.u32 %s38, %s46
      %s49 = ssub.s32 %s44, %s47
      %s50 = ssub.s32 %s45, %s48
      %s51 = sor.u32 %s49, %s50
      %p52 = scmp.eq.s32.totalorder %s51, 0
      %s54 = sadd.s32 %s53, 1
      %s55 = scalar_select %p52, %s53, %s54
      %p58 = pneg %p52
      %p59 = scmp.eq.s32.totalorder %s23, 1
      %p60 = por %p58, %p59
      %p61 = scmp.ne.s32.totalorder %s53, %s56
      %p62 = scmp.eq.s32.totalorder %s23, 0
      %p63 = por %p61, %p62
      %p64 = scmp.ne.s32.totalorder %s53, %s56
      %p65 = scmp.eq.s32.totalorder %s28, 1
      %p66 = por %p64, %p65
      %p67 = scmp.ne.s32.totalorder %s56, %s57
      %p68 = scmp.eq.s32.totalorder %s28, 0
      %p69 = por %p67, %p68
      %p70 = scmp.ne.s32.totalorder %s56, %s57
      %p71 = scmp.eq.s32.totalorder %s29, 1
      %p72 = por %p70, %p71
      %p74 = scmp.ne.s32.totalorder %s57, %s73
      %p75 = scmp.eq.s32.totalorder %s29, 0
      %p76 = por %p74, %p75
      %s77 = ssub.s32 %s30, %s42
      %s78 = ssub.s32 %s31, %s38
      %s79 = sor.u32 %s77, %s78
      %p80 = scmp.eq.s32.totalorder %s79, 0
      %s82 = sadd.s32 %s81, 1
      %s83 = scalar_select %p80, %s81, %s82
      %p86 = pneg %p80
      %p87 = scmp.eq.s32.totalorder %s23, 1
      %p88 = por %p86, %p87
      %p89 = scmp.ne.s32.totalorder %s81, %s84
      %p90 = scmp.eq.s32.totalorder %s23, 0
      %p91 = por %p89, %p90
      %p92 = scmp.ne.s32.totalorder %s81, %s84
      %p93 = scmp.eq.s32.totalorder %s28, 1
      %p94 = por %p92, %p93
      %p95 = scmp.ne.s32.totalorder %s84, %s85
      %p96 = scmp.eq.s32.totalorder %s28, 0
      %p97 = por %p95, %p96
      %p98 = scmp.ne.s32.totalorder %s84, %s85
      %p99 = scmp.eq.s32.totalorder %s29, 1
      %p100 = por %p98, %p99
      %p102 = scmp.ne.s32.totalorder %s85, %s101
      %p103 = scmp.eq.s32.totalorder %s29, 0
      %p104 = por %p102, %p103
      %p105 = scmp.le.s32.totalorder 1, %s23
      %p106 = scmp.lt.s32.totalorder %s23, 3
      %p107 = pnand %p105, %p106
      %p108 = pneg %p107
      // Predicated region
      $region9: #{tpu_custom_call.1} parent=5 // pred_check
        _
      $region10: #{tpu_custom_call.1} parent=5 // pred_check_branch
        %110 = sbr.rel (%p107) target = $region12
      $region11: #{tpu_custom_call.1} parent=5 // pred_region
        %s111 = ssub.s32 %s23, 1
      $region12: #{tpu_custom_call.1} parent=5 // pred_fallthru
        _
      %p112 = scmp.lt.s32.totalorder %s23, 2
      // Predicated region
      $region13: #{tpu_custom_call.1} parent=5 // pred_check
        %p113 = pneg %p112
      $region14: #{tpu_custom_call.1} parent=5 // pred_check_branch
        %115 = sbr.rel (%p113) target = $region16
      $region15: #{tpu_custom_call.1} parent=5 // pred_region
        // Predicated region
        $region17: #{tpu_custom_call.1} parent=15 // pred_check
          %p116 = pneg %p63
        $region18: #{tpu_custom_call.1} parent=15 // pred_check_branch
          %118 = sbr.rel (%p116) target = $region20
        $region19: #{tpu_custom_call.1} parent=15 // pred_region
          %s119 = sand.u32 %s53, 1
          %s120 = scalar_lea.sflag [#allocation6], %s119
          %s121 = sand.u32 %s53, 1
          %s122 = smul.addr %s121, 8
          %s123 = scalar_lea.vmem [#allocation5], %s122
          %s124 = sld [smem:[#allocation3 + %s30]]
          %s125 = smul.u32 %s30, %s124
          %s126 = smul.u32 %s31, %s124
          %s128 = ssub.s32 128, 128
          %129 = vsyncadd %s120, %s128
          %s130 = sadd.s32 %s126, %s125
          %s131 = smul.addr %s130, 128
          %s132 = scalar_lea.hbm %s2, %s131
          %s134 = sshll.u32 %s123, 4
          %s135 = int_to_ptr.vmem [resolvable:$true] %s134
          %137 = dma.hbm_to_vmem [thread:$0]  %s132, 128, %s135, %s120
        $region20: #{tpu_custom_call.1} parent=15 // pred_fallthru
          _
      $region16: #{tpu_custom_call.1} parent=5 // pred_fallthru
        _
      %p138 = scmp.le.s32.totalorder 1, %s23
      %p139 = scmp.lt.s32.totalorder %s23, 3
      %p140 = pnand %p138, %p139
      %p141 = pneg %p140
      // Predicated region
      $region21: #{tpu_custom_call.1} parent=5 // pred_check
        _
      $region22: #{tpu_custom_call.1} parent=5 // pred_check_branch
        %143 = sbr.rel (%p140) target = $region24
      $region23: #{tpu_custom_call.1} parent=5 // pred_region
        %s144 = ssub.s32 %s23, 1
        %s145 = sand.u32 %s56, 1
        %s146 = scalar_lea.sflag [#allocation6], %s145
        %s147 = sand.u32 %s56, 1
        %s148 = smul.addr %s147, 8
        %s149 = scalar_lea.vmem [#allocation5], %s148
        // Predicated region
        $region25: #{tpu_custom_call.1} parent=23 // pred_check
          %p150 = pneg %p69
        $region26: #{tpu_custom_call.1} parent=23 // pred_check_branch
          %152 = sbr.rel (%p150) target = $region28
        $region27: #{tpu_custom_call.1} parent=23 // pred_region
          %153 = dma.done %s146, 128
        $region28: #{tpu_custom_call.1} parent=23 // pred_fallthru
          _
        %s154 = sand.u32 %s56, 1
        %s155 = scalar_lea.sflag [#allocation6], %s154
        %s156 = sand.u32 %s56, 1
        %s157 = smul.addr %s156, 8
        %s158 = scalar_lea.vmem [#allocation5], %s157
        %p159 = pneg %p69
        %p160 = pneg %p66
        %p161 = pneg %p97
        %p162 = pneg %p94
        %s163 = sand.u32 %s84, 1
        %s164 = scalar_lea.sflag [#allocation7], %s163
        %s165 = sand.u32 %s84, 1
        %s166 = smul.addr %s165, 8
        %s167 = scalar_lea.vmem [#allocation8], %s166
        %s168 = sld [smem:[#allocation3 + %s32]]
        %s169 = smul.u32 %s32, %s168
        %s170 = smul.u32 %s33, %s168
        %s171 = sld [smem:[#allocation3 + %s32]]
        %p172 = scmp.ne.s32.totalorder %s171, 0
        // Predicated region
        $region29: #{tpu_custom_call.1} parent=23 // pred_check
          %p173 = pneg %p172
        $region30: #{tpu_custom_call.1} parent=23 // pred_check_branch
          %175 = sbr.rel (%p173) target = $region32
        $region31: #{tpu_custom_call.1} parent=23 // pred_region
          %v176 = vld [vmem:[%s149] sm:$0xff]
          %s177 = sld [smem:[#allocation4 + %s32]]
          %v178 = vstv %s177
          %v179 = vmul.f32 %v176, %v178
          %180 = vst [vmem:[%s167] sm:$0xff] %v179
        $region32: #{tpu_custom_call.1} parent=23 // pred_fallthru
          _
        %s181 = sld [smem:[#allocation3 + %s32]]
        %p182 = scmp.eq.s32.totalorder %s181, 0
        // Predicated region
        $region33: #{tpu_custom_call.1} parent=23 // pred_check
          %p183 = pneg %p182
        $region34: #{tpu_custom_call.1} parent=23 // pred_check_branch
          %185 = sbr.rel (%p183) target = $region36
        $region35: #{tpu_custom_call.1} parent=23 // pred_region
          %186 = vst [vmem:[%s167] sm:$0xff] 0.0
        $region36: #{tpu_custom_call.1} parent=23 // pred_fallthru
          _
        %s187 = sand.u32 %s84, 1
        %s188 = scalar_lea.sflag [#allocation7], %s187
        %s189 = sand.u32 %s84, 1
        %s190 = smul.addr %s189, 8
        %s191 = scalar_lea.vmem [#allocation8], %s190
        // Predicated region
        $region37: #{tpu_custom_call.1} parent=23 // pred_check
          %p192 = pneg %p94
        $region38: #{tpu_custom_call.1} parent=23 // pred_check_branch
          %194 = sbr.rel (%p192) target = $region40
        $region39: #{tpu_custom_call.1} parent=23 // pred_region
          %s196 = ssub.s32 128, 128
          %197 = vsyncadd %s188, %s196
          %s198 = sadd.s32 %s33, %s32
          %s199 = smul.addr %s198, 128
          %s200 = scalar_lea.hbm %s3, %s199
          %s202 = sshll.u32 %s191, 4
          %s203 = int_to_ptr.vmem [resolvable:$true] %s202
          %205 = dma.vmem_to_hbm [thread:$0]  %s203, 128, %s200, %s188
        $region40: #{tpu_custom_call.1} parent=23 // pred_fallthru
          _
      $region24: #{tpu_custom_call.1} parent=5 // pred_fallthru
        _
      %p206 = scmp.le.s32.totalorder 2, %s23
      // Predicated region
      $region41: #{tpu_custom_call.1} parent=5 // pred_check
        %p207 = pneg %p206
      $region42: #{tpu_custom_call.1} parent=5 // pred_check_branch
        %209 = sbr.rel (%p207) target = $region44
      $region43: #{tpu_custom_call.1} parent=5 // pred_region
        %s210 = ssub.s32 %s23, 2
        // Predicated region
        $region45: #{tpu_custom_call.1} parent=43 // pred_check
          %p211 = pneg %p100
        $region46: #{tpu_custom_call.1} parent=43 // pred_check_branch
          %213 = sbr.rel (%p211) target = $region48
        $region47: #{tpu_custom_call.1} parent=43 // pred_region
          %s214 = sand.u32 %s85, 1
          %s215 = scalar_lea.sflag [#allocation7], %s214
          %s216 = sand.u32 %s85, 1
          %s217 = smul.addr %s216, 8
          %s218 = scalar_lea.vmem [#allocation8], %s217
          %219 = dma.done %s215, 128
        $region48: #{tpu_custom_call.1} parent=43 // pred_fallthru
          _
      $region44: #{tpu_custom_call.1} parent=5 // pred_fallthru
        _
    $region6: #{tpu_custom_call.1} parent=1 // loop_footer
      %s27 = sadd.s32 1, %s23
    $region7: #{tpu_custom_call.1} parent=1 // loop_footer_branch
      %22 = sbr.rel target = $region3
    $region8: #{tpu_custom_call.1} parent=1 // loop_exit
      _
    %220 = vsyncpa [#allocation6], 1
    %s221 = scalar_lea.sflag [#allocation6], 1
    %222 = vsyncpa %s221, 1
    %223 = vsyncpa [#allocation7], 1
    %s224 = scalar_lea.sflag [#allocation7], 1
    %225 = vsyncpa %s224, 1

</llo_original>
